<compile_context>
chip_gen: v7x
topology: tpu7x:2x2x1
jax: 0.10.0
libtpu: 0.0.40
codegen_flags: <defaults>
</compile_context>

<pallas_src>
import jax
import jax.numpy as jnp
from jax.experimental import pallas as pl
from jax.experimental.pallas import tpu as pltpu

IN_FEATURES = 17
OUT_FEATURES = 23


def linear_hardswish_kernel(x_ref, wt_ref, b_ref, o_ref):
    # x: (tb, IN), wt: (IN, OUT) (pre-transposed), b: (1, OUT)
    x = x_ref[...]
    wt = wt_ref[...]
    b = b_ref[...]
    # Canonical MXU feed: contraction on the last dim of LHS / first dim of RHS.
    v0 = jnp.dot(x, wt, preferred_element_type=jnp.float32) + b
    # hardswish-style: v0 * clamp(v0 + 3, 0, 6) * (1/6)  (division constant-folded)
    v1 = v0 * jnp.clip(v0 + 3.0, 0.0, 6.0)
    o_ref[...] = (v1 * (1.0 / 6.0)).astype(o_ref.dtype)


def prepare_params(weight, bias):
    """One-time parameter prep (outside the hot path).

    weight: (OUT, IN) PyTorch layout -> (IN, OUT) so the kernel matmul is canonical.
    bias:   (OUT,) -> (1, OUT).
    """
    return jnp.asarray(weight).T, jnp.asarray(bias).reshape(1, OUT_FEATURES)


def _round_up(n, m):
    return ((n + m - 1) // m) * m


def _xla_forward(x, w_t, bias2d):
    """Small-batch latency path: one fused XLA expression."""
    v0 = jnp.dot(x, w_t, preferred_element_type=jnp.float32) + bias2d
    return v0 * jnp.clip(v0 + 3.0, 0.0, 6.0) * (1.0 / 6.0)


def pallas_forward(x, w_t, bias2d, *, tile_b=4096):
    """x: (B, 17) f32; w_t: (17, 23) f32; bias2d: (1, 23) f32."""
    B = x.shape[0]
    # Cap so 2x double-buffered (x + out) tiles stay well under v5e's 16 MiB scoped VMEM.
    tile_b = min(tile_b, 32768)
    if B <= tile_b:
        # Split into >=2 tiles when large enough so v7x's two TensorCores both get work;
        # for small B a single full-array block is fine (and overhead-irrelevant).
        tb = _round_up(pl.cdiv(B, 2), 8) if B >= 1024 else B
    else:
        tb = min(tile_b, _round_up(pl.cdiv(B, 2), 8))
    tb = max(1, min(tb, B)) if B < 8 else tb
    grid = (pl.cdiv(B, tb),)
    return pl.pallas_call(
        linear_hardswish_kernel,
        out_shape=jax.ShapeDtypeStruct((B, OUT_FEATURES), jnp.float32),
        grid=grid,
        in_specs=[
            pl.BlockSpec((tb, IN_FEATURES), lambda i: (i, 0)),
            pl.BlockSpec((IN_FEATURES, OUT_FEATURES), lambda i: (0, 0)),
            pl.BlockSpec((1, OUT_FEATURES), lambda i: (0, 0)),
        ],
        out_specs=pl.BlockSpec((tb, OUT_FEATURES), lambda i: (i, 0)),
        compiler_params=pltpu.CompilerParams(
            dimension_semantics=("parallel",),  # batch tiles shard across TCs on v7x
        ),
    )(x, w_t, bias2d)


def model_forward(x, w_t, bias2d, *, tile_b=4096, min_pallas_batch=1024):
    """Forward pass matching the PyTorch module: Linear(17,23) then x*clamp(x+3,0,6)/6."""
    B = x.shape[0]
    if B < min_pallas_batch:
        return _xla_forward(x, w_t, bias2d)
    return pallas_forward(x, w_t, bias2d, tile_b=tile_b)


def _reference(x, weight, bias):
    v0 = x @ weight.T + bias
    return v0 * jnp.clip(v0 + 3.0, 0.0, 6.0) / 6.0


if __name__ == "__main__":
    key = jax.random.PRNGKey(0)
    kx, kw, kb, kx2 = jax.random.split(key, 4)

    # Same shapes as torch.nn.Linear(17, 23) with x0 = torch.randn(1, 17).
    x = jax.random.normal(kx, (1, IN_FEATURES), dtype=jnp.float32)
    bound = 1.0 / jnp.sqrt(IN_FEATURES)
    weight = jax.random.uniform(
        kw, (OUT_FEATURES, IN_FEATURES), dtype=jnp.float32, minval=-bound, maxval=bound
    )
    bias = jax.random.uniform(
        kb, (OUT_FEATURES,), dtype=jnp.float32, minval=-bound, maxval=bound
    )

    w_t, b2d = prepare_params(weight, bias)  # one-time prep outside the hot path

    # Spec case, B = 1: goes through the small-batch fused-XLA latency path.
    out_small = model_forward(x, w_t, b2d)
    jax.block_until_ready(out_small)
    ref_small = _reference(x, weight, bias)
    assert out_small.shape == (1, OUT_FEATURES)
    assert jnp.allclose(out_small, ref_small, atol=1e-5, rtol=1e-5)

    # Force the Pallas kernel at B = 1 (single full-array block) to validate it too.
    out_p1 = pallas_forward(x, w_t, b2d)
    jax.block_until_ready(out_p1)
    assert out_p1.shape == (1, OUT_FEATURES)
    assert jnp.allclose(out_p1, ref_small, atol=1e-5, rtol=1e-5)

    # Batched Pallas path: exercises the batch grid (2 tiles of 8 rows).
    xb = jax.random.normal(kx2, (16, IN_FEATURES), dtype=jnp.float32)
    out_b = pallas_forward(xb, w_t, b2d, tile_b=8)
    jax.block_until_ready(out_b)
    ref_b = _reference(xb, weight, bias)
    assert out_b.shape == (16, OUT_FEATURES)
    assert jnp.allclose(out_b, ref_b, atol=1e-5, rtol=1e-5)

    print("KERNEL_OK")
</pallas_src>

<mosaic_0001>
module attributes {stable_mosaic.version = 11 : i64} {
  func.func @linear_hardswish_kernel(%arg0: i32, %arg1: memref<1x17xf32, #tpu.memory_space<vmem>>, %arg2: memref<17x23xf32, #tpu.memory_space<vmem>>, %arg3: memref<1x23xf32, #tpu.memory_space<vmem>>, %arg4: memref<1x23xf32, #tpu.memory_space<vmem>>) attributes {dimension_semantics = [#tpu.dimension_semantics<parallel>], iteration_bounds = array<i64: 1>, scalar_prefetch = 0 : i64, scratch_operands = 0 : i64, tpu.core_type = #tpu.core_type<tc>, window_params = [{transform_indices = @transform_0, window_bounds = array<i64: 1, 17>}, {pipeline_mode = #tpu.pipeline_mode<synchronous>, transform_indices = @transform_1, window_bounds = array<i64: 17, 23>}, {pipeline_mode = #tpu.pipeline_mode<synchronous>, transform_indices = @transform_2, window_bounds = array<i64: 1, 23>}, {transform_indices = @transform_3, window_bounds = array<i64: 1, 23>}]} {
    %c0 = arith.constant 0 : index
    %c0_0 = arith.constant 0 : index
    %0 = vector.load %arg1[%c0, %c0_0] : memref<1x17xf32, #tpu.memory_space<vmem>>, vector<1x17xf32>
    %c0_1 = arith.constant 0 : index
    %c0_2 = arith.constant 0 : index
    %1 = vector.load %arg2[%c0_1, %c0_2] : memref<17x23xf32, #tpu.memory_space<vmem>>, vector<17x23xf32>
    %c0_3 = arith.constant 0 : index
    %c0_4 = arith.constant 0 : index
    %2 = vector.load %arg3[%c0_3, %c0_4] : memref<1x23xf32, #tpu.memory_space<vmem>>, vector<1x23xf32>
    %cst = arith.constant dense<0.000000e+00> : vector<1x23xf32>
    %3 = tpu.matmul %0, %1, %cst {dimension_numbers = #tpu.dot_dimension_numbers<[1], [0], [0], [1], [0, 0, 1, 1], [], []>} : vector<1x17xf32>, vector<17x23xf32>, vector<1x23xf32> -> vector<1x23xf32>
    %4 = arith.addf %3, %2 : vector<1x23xf32>
    %cst_5 = arith.constant 3.000000e+00 : f32
    %5 = vector.broadcast %cst_5 : f32 to vector<1x23xf32>
    %6 = arith.addf %4, %5 : vector<1x23xf32>
    %cst_6 = arith.constant 0.000000e+00 : f32
    %cst_7 = arith.constant 6.000000e+00 : f32
    %7 = vector.broadcast %cst_6 : f32 to vector<1x23xf32>
    %8 = arith.maximumf %7, %6 : vector<1x23xf32>
    %9 = vector.broadcast %cst_7 : f32 to vector<1x23xf32>
    %10 = arith.minimumf %9, %8 : vector<1x23xf32>
    %11 = arith.mulf %4, %10 : vector<1x23xf32>
    %cst_8 = arith.constant 0.166666672 : f32
    %12 = vector.broadcast %cst_8 : f32 to vector<1x23xf32>
    %13 = arith.mulf %11, %12 : vector<1x23xf32>
    %c0_9 = arith.constant 0 : index
    %c0_10 = arith.constant 0 : index
    %14 = vector.load %arg4[%c0_9, %c0_10] : memref<1x23xf32, #tpu.memory_space<vmem>>, vector<1x23xf32>
    tpu.vector_store %arg4[%c0_9, %c0_10], %13 {strides = array<i32>} : memref<1x23xf32, #tpu.memory_space<vmem>>, vector<1x23xf32>,
    return
  }
  func.func @transform_0(%arg0: i32) -> (i32, i32) {
    %c0_i32 = arith.constant 0 : i32
    %c0_i32_0 = arith.constant 0 : i32
    return %arg0, %c0_i32 : i32, i32
  }
  func.func @transform_1(%arg0: i32) -> (i32, i32) {
    %c0_i32 = arith.constant 0 : i32
    %c0_i32_0 = arith.constant 0 : i32
    %c0_i32_1 = arith.constant 0 : i32
    return %c0_i32, %c0_i32_0 : i32, i32
  }
  func.func @transform_2(%arg0: i32) -> (i32, i32) {
    %c0_i32 = arith.constant 0 : i32
    %c0_i32_0 = arith.constant 0 : i32
    %c0_i32_1 = arith.constant 0 : i32
    return %c0_i32, %c0_i32_0 : i32, i32
  }
  func.func @transform_3(%arg0: i32) -> (i32, i32) {
    %c0_i32 = arith.constant 0 : i32
    %c0_i32_0 = arith.constant 0 : i32
    return %arg0, %c0_i32 : i32, i32
  }
}

</mosaic_0001>

<llo_original>
// kernel: tpu_custom_call.1
$region0: #{tpu_custom_call.1}
  #allocation0 [shape = 'u32[]', space=smem, size = 0x4, offset = 0x4, fixed_abs, tag = 'smem constant byte address 0x4 - core index']
  #allocation1 [shape = 'u32[144,128]{1,0:T(1,128)}', space=vmem, size = 0x12000, scoped, tag = 'internal scratch']
  %s0 = inlined_call_operand.hbm [shape: f32[1,17], index: 0, kind: input, shape index: {}]
  %s1 = inlined_call_operand.hbm [shape: f32[17,23], index: 1, kind: input, shape index: {}]
  %s2 = inlined_call_operand.vmem [shape: f32[1,23], index: 2, kind: input, shape index: {}]
  %s3 = inlined_call_operand.hbm [shape: f32[1,23], index: 3, kind: output, shape index: {}]
  %s4 = sld [smem:[#allocation0]]
  $region30: #{tpu_custom_call.1} parent=0
    _
  %s6 = ssub.s32 1, %s4
  %s7 = scalar_select 0, %s6, %s4
  $region1: #{tpu_custom_call.1} parent=0
    #allocation2 [shape = 'u8[512]{0}', space=vmem, size = 0x400, scoped, tag = 'input window, operand 0, single buffered']
    #allocation3 [shape = 's32[1]{0}', space=sflag, size = 0x4, scoped, tag = 'scoped memory for tpu_custom_call.1']
    #allocation4 [shape = 's32[1]{0}', space=sflag, size = 0x4, scoped, tag = 'scoped memory for tpu_custom_call.1']
    #allocation5 [shape = 'u8[12288]{0}', space=vmem, size = 0x3000, scoped, tag = 'input window, operand 1, single buffered']
    #allocation6 [shape = 's32[1]{0}', space=sflag, size = 0x4, scoped, tag = 'scoped memory for tpu_custom_call.1']
    #allocation7 [shape = 'u8[512]{0}', space=vmem, size = 0x400, scoped, tag = 'output window, operand 0, single buffered']
    %8 = vsyncpa [#allocation3], 0
    %9 = vsyncpa [#allocation6], 0
    %10 = vsyncpa [#allocation4], 0
    // Predicated region
    $region2: #{tpu_custom_call.1} parent=1 // pred_check
      _
    $region3: #{tpu_custom_call.1} parent=1 // pred_check_branch
      %12 = sbr.rel (0) target = $region5
    $region4: #{tpu_custom_call.1} parent=1 // pred_region
      %s14 = ssub.s32 16, 16
      %15 = vsyncadd [#allocation3], %s14
      %s17 = sshll.u32 [#allocation2], 4
      %s18 = int_to_ptr.vmem [resolvable:$true] %s17
      %20 = dma.hbm_to_vmem [thread:$0]  %s0, 16, %s18, [#allocation3]
    $region5: #{tpu_custom_call.1} parent=1 // pred_fallthru
      _
    // Predicated region
    $region6: #{tpu_custom_call.1} parent=1 // pred_check
      _
    $region7: #{tpu_custom_call.1} parent=1 // pred_check_branch
      %22 = sbr.rel (0) target = $region9
    $region8: #{tpu_custom_call.1} parent=1 // pred_region
      %s24 = ssub.s32 384, 384
      %25 = vsyncadd [#allocation6], %s24
      %s26 = sshll.u32 [#allocation5], 4
      %s27 = int_to_ptr.vmem [resolvable:$true] %s26
      %32 = dma.hbm_to_vmem [thread:$0]  %s1, 384, %s27, [#allocation6], 128, 128, 8
    $region9: #{tpu_custom_call.1} parent=1 // pred_fallthru
      _
    // Predicated region
    $region10: #{tpu_custom_call.1} parent=1 // pred_check
      _
    $region11: #{tpu_custom_call.1} parent=1 // pred_check_branch
      %34 = sbr.rel (0) target = $region13
    $region12: #{tpu_custom_call.1} parent=1 // pred_region
      _
    $region13: #{tpu_custom_call.1} parent=1 // pred_fallthru
      _
    // Predicated region
    $region14: #{tpu_custom_call.1} parent=1 // pred_check
      _
    $region15: #{tpu_custom_call.1} parent=1 // pred_check_branch
      %36 = sbr.rel (0) target = $region17
    $region16: #{tpu_custom_call.1} parent=1 // pred_region
      %37 = dma.done [#allocation3], 16
    $region17: #{tpu_custom_call.1} parent=1 // pred_fallthru
      _
    // Predicated region
    $region18: #{tpu_custom_call.1} parent=1 // pred_check
      _
    $region19: #{tpu_custom_call.1} parent=1 // pred_check_branch
      %39 = sbr.rel (0) target = $region21
    $region20: #{tpu_custom_call.1} parent=1 // pred_region
      %40 = dma.done [#allocation6], 384
    $region21: #{tpu_custom_call.1} parent=1 // pred_fallthru
      _
    %v41 = vld [vmem:[#allocation2] sm:$0x1]
    %v42 = vld [vmem:[#allocation5] sm:$0xff]
    %v43 = vld [vmem:[#allocation5 + $0x8] sm:$0xff]
    %v44 = vld [vmem:[#allocation5 + $0x10] sm:$0x1]
    %v45 = vld [vmem:[%s2] sm:$0x1]
    %vm46 = vcmask 138240
    %v48 = vsel %vm46, %v41, 0
    %vm50 = vcmask 1040384
    %v52 = vsel %vm50, %v44, 0
    %54 = vmatprep.subr.mxu0 0.0
    %55 = vmatpush1.msra.mxu0 %v42
    %56 = vmatprep.subr.mxu0 0.0
    %57 = vmatpush1.msra.mxu0 %v43
    %58 = vmatprep.subr.mxu0 0.0
    %59 = vmatpush1.msra.mxu0 %v52
    %60 = vmatprep.subr.mxu0 0.0
    %61 = vmatpush1.msra.mxu0 0.0
    %62 = vmatprep.subr.mxu0 0.0
    %63 = vmatpush1.msra.mxu0 0.0
    %64 = vmatprep.subr.mxu0 0.0
    %65 = vmatpush1.msra.mxu0 0.0
    %66 = vmatprep.subr.mxu0 0.0
    %67 = vmatpush1.msra.mxu0 0.0
    %68 = vmatprep.subr.mxu0 0.0
    %69 = vmatpush1.msra.mxu0 0.0
    %70 = vmatprep.subr.mxu0 0.0
    %71 = vmatpush1.msra.mxu0 0.0
    %72 = vmatprep.subr.mxu0 0.0
    %73 = vmatpush1.msra.mxu0 0.0
    %74 = vmatprep.subr.mxu0 0.0
    %75 = vmatpush1.msra.mxu0 0.0
    %76 = vmatprep.subr.mxu0 0.0
    %77 = vmatpush1.msra.mxu0 0.0
    %78 = vmatprep.subr.mxu0 0.0
    %79 = vmatpush1.msra.mxu0 0.0
    %80 = vmatprep.subr.mxu0 0.0
    %81 = vmatpush1.msra.mxu0 0.0
    %82 = vmatprep.subr.mxu0 0.0
    %83 = vmatpush1.msra.mxu0 0.0
    %84 = vmatprep.subr.mxu0 0.0
    %85 = vmatpush1.msra.mxu0 0.0
    %86 = vmatprep.subr.mxu0 0.0
    %87 = vmatpush1.msra.mxu0 0.0
    %88 = vmatprep.subr.mxu0 0.0
    %89 = vmatpush1.msra.mxu0 0.0
    %90 = vmatprep.subr.mxu0 0.0
    %91 = vmatpush1.msra.mxu0 0.0
    %92 = vmatprep.subr.mxu0 0.0
    %93 = vmatpush1.msra.mxu0 0.0
    %94 = vmatprep.subr.mxu0 0.0
    %95 = vmatpush1.msra.mxu0 0.0
    %96 = vmatprep.subr.mxu0 0.0
    %97 = vmatpush1.msra.mxu0 0.0
    %98 = vmatprep.subr.mxu0 0.0
    %99 = vmatpush1.msra.mxu0 0.0
    %100 = vmatprep.subr.mxu0 0.0
    %101 = vmatpush1.msra.mxu0 0.0
    %102 = vmatprep.subr.mxu0 0.0
    %103 = vmatpush1.msra.mxu0 0.0
    %104 = vmatprep.subr.mxu0 0.0
    %105 = vmatpush1.msra.mxu0 0.0
    %106 = vmatprep.subr.mxu0 0.0
    %107 = vmatpush1.msra.mxu0 0.0
    %108 = vmatprep.subr.mxu0 0.0
    %109 = vmatpush1.msra.mxu0 0.0
    %110 = vmatprep.subr.mxu0 0.0
    %111 = vmatpush1.msra.mxu0 0.0
    %112 = vmatprep.subr.mxu0 0.0
    %113 = vmatpush1.msra.mxu0 0.0
    %114 = vmatprep.subr.mxu0 0.0
    %115 = vmatpush1.msra.mxu0 0.0
    %116 = vmatprep.subr.mxu0 0.0
    %117 = vmatpush1.msra.mxu0 0.0
    %118 = vmatprep.mubr.f32.mxu0 0.0
    %119 = vmatmul.mubr.f32.gmra.mrb[0].mxu0 %v48
    %v120 = vpop.f32.mrb[0].mxu0
    %v121 = vadd.f32 %v45, %v120
    %v122 = vpop.f32.mrb[0].mxu0
    %123 = vdwg.mxu0
    %v124 = vadd.f32 %v121, 3.0
    %v125 = vmax.f32 %v124, 0.0
    %v126 = vmin.f32 %v125, 6.0
    %v127 = vmul.f32 %v121, %v126
    %v128 = vmul.f32 %v127, 0.16666667
    %vm129 = vcmask 180224
    %130 = vst.msk [vmem:[#allocation7] sm:$0x1] %vm129, %v128
    // Predicated region
    $region22: #{tpu_custom_call.1} parent=1 // pred_check
      _
    $region23: #{tpu_custom_call.1} parent=1 // pred_check_branch
      %132 = sbr.rel (0) target = $region25
    $region24: #{tpu_custom_call.1} parent=1 // pred_region
      %s134 = ssub.s32 16, 16
      %135 = vsyncadd [#allocation4], %s134
      %s137 = sshll.u32 [#allocation7], 4
      %s138 = int_to_ptr.vmem [resolvable:$true] %s137
      %140 = dma.vmem_to_hbm [thread:$0]  %s138, 16, %s3, [#allocation4]
    $region25: #{tpu_custom_call.1} parent=1 // pred_fallthru
      _
    // Predicated region
    $region26: #{tpu_custom_call.1} parent=1 // pred_check
      _
    $region27: #{tpu_custom_call.1} parent=1 // pred_check_branch
      %142 = sbr.rel (0) target = $region29
    $region28: #{tpu_custom_call.1} parent=1 // pred_region
      %143 = dma.done [#allocation4], 16
    $region29: #{tpu_custom_call.1} parent=1 // pred_fallthru
      _
    %144 = vsyncpa [#allocation3], 1
    %145 = vsyncpa [#allocation6], 1
    %146 = vsyncpa [#allocation4], 1

</llo_original>
